<compile_context>
chip_gen: v6e
topology: v6e:2x2x1
jax: 0.10.0
libtpu: 0.0.40
codegen_flags: <defaults>
</compile_context>

<pallas_src>
import math

import jax
import jax.numpy as jnp
from jax.experimental import pallas as pl
from jax.experimental.pallas import tpu as pltpu

# ----------------------------- layout constants -----------------------------
FIN1, H1, H2, OUT = 57, 20, 10, 2      # 57 -> 20 -> 10 -> 2
KPAD = 64                              # layer-1 contraction padded to 64
LANES = 128                            # lane width of packed slabs

# column offsets inside the packed activation / output slab
FC1_OFF, FC2_OFF, OUT_OFF = 0, 32, 64

# row offsets inside the packed parameter slab
W1_ROW, W2_ROW, W3_ROW = 0, 64, 192            # weight blocks: 64 / 128 / 128 rows
B1_ROW, B2_ROW, B3_ROW = 320, 328, 336         # bias rows (8-aligned)
P_ROWS = 344                                    # total rows (multiple of 8)


def _round_up(n, m):
    return ((n + m - 1) // m) * m


# --------------------------------- kernel -----------------------------------
def mlp_kernel(x_ref, p_ref, o_ref):
    x = x_ref[...]                                   # [TB, 64]

    w1 = p_ref[W1_ROW:W1_ROW + KPAD, :]              # [64, 128]
    w2 = p_ref[W2_ROW:W2_ROW + LANES, :]             # [128, 128]
    w3 = p_ref[W3_ROW:W3_ROW + LANES, :]             # [128, 128]
    b1 = p_ref[B1_ROW:B1_ROW + 1, :]                 # [1, 128]
    b2 = p_ref[B2_ROW:B2_ROW + 1, :]
    b3 = p_ref[B3_ROW:B3_ROW + 1, :]

    # hidden1: Linear(57->20) + ReLU   (fc1 lands in lanes 0:20, zeros elsewhere)
    h1 = jnp.maximum(
        jnp.dot(x, w1, preferred_element_type=jnp.float32) + b1, 0.0)
    # hidden2: Linear(20->10) + ReLU   (fc2 lands in lanes 32:42, zeros elsewhere)
    h2 = jnp.maximum(
        jnp.dot(h1, w2, preferred_element_type=jnp.float32) + b2, 0.0)
    # classifica: Linear(10->2) + Sigmoid  (logits land in lanes 64:66)
    z = jnp.dot(h2, w3, preferred_element_type=jnp.float32) + b3
    s = 1.0 / (1.0 + jnp.exp(-z))

    # Compose the lane-dense output slab with one select and one full store:
    #   cols 0:64  -> h1 + h2 (fc1 @ 0:20, fc2 @ 32:42, rest exactly 0)
    #   cols 64:   -> sigmoid (out @ 64:66, rest 0.5 and sliced away in wrapper)
    col = jax.lax.broadcasted_iota(jnp.int32, h1.shape, 1)
    o_ref[...] = jnp.where(col < OUT_OFF, h1 + h2, s)


# ------------------------------ host wrappers --------------------------------
def pack_params(w1, b1, w2, b2, w3, b3):
    """Pack all weights/biases into one lane-padded [344, 128] f32 slab."""
    p = jnp.zeros((P_ROWS, LANES), jnp.float32)
    # W1: input features on rows 0:57, outputs at lanes 0:20
    p = p.at[W1_ROW:W1_ROW + FIN1, FC1_OFF:FC1_OFF + H1].set(w1)
    # W2: inputs read from h1 lanes 0:20, outputs at lanes 32:42
    p = p.at[W2_ROW + FC1_OFF:W2_ROW + FC1_OFF + H1,
             FC2_OFF:FC2_OFF + H2].set(w2)
    # W3: inputs read from h2 lanes 32:42, outputs at lanes 64:66
    p = p.at[W3_ROW + FC2_OFF:W3_ROW + FC2_OFF + H2,
             OUT_OFF:OUT_OFF + OUT].set(w3)
    p = p.at[B1_ROW, FC1_OFF:FC1_OFF + H1].set(b1.reshape(-1))
    p = p.at[B2_ROW, FC2_OFF:FC2_OFF + H2].set(b2.reshape(-1))
    p = p.at[B3_ROW, OUT_OFF:OUT_OFF + OUT].set(b3.reshape(-1))
    return p


def mlp_classification(x, params, *, max_tile=512):
    """x: [B, 57]. Returns (fc1 [B,20], fc2 [B,10], output [B,2])."""
    w1, b1, w2, b2, w3, b3 = params
    B = x.shape[0]

    p_packed = pack_params(w1, b1, w2, b2, w3, b3)

    # Batch tile: 8-aligned, capped so double-buffered tiles stay far below
    # v7x's 64 MiB physical / 32 MiB default-scoped VMEM.
    tb = min(max_tile, _round_up(B, 8))
    b_pad = _round_up(B, tb)

    # Pad batch to the grid and the contraction dim 57 -> 64 (zeros are inert).
    x_pad = jnp.zeros((b_pad, KPAD), jnp.float32)
    x_pad = x_pad.at[:B, :FIN1].set(x.astype(jnp.float32))

    slab = pl.pallas_call(
        mlp_kernel,
        out_shape=jax.ShapeDtypeStruct((b_pad, LANES), jnp.float32),
        grid_spec=pltpu.PrefetchScalarGridSpec(
            num_scalar_prefetch=0,
            grid=(b_pad // tb,),
            in_specs=[
                pl.BlockSpec((tb, KPAD), lambda i: (i, 0)),        # x tile
                pl.BlockSpec((P_ROWS, LANES), lambda i: (0, 0)),   # params (resident)
            ],
            out_specs=pl.BlockSpec((tb, LANES), lambda i: (i, 0)),
        ),
        compiler_params=pltpu.CompilerParams(
            dimension_semantics=("parallel",)),
    )(x_pad, p_packed)

    fc1 = slab[:B, FC1_OFF:FC1_OFF + H1]
    fc2 = slab[:B, FC2_OFF:FC2_OFF + H2]
    out = slab[:B, OUT_OFF:OUT_OFF + OUT]
    return fc1, fc2, out


# ------------------------------ init / reference -----------------------------
def init_params(key):
    """Deterministic PyTorch-style init: U(-1/sqrt(fan_in), 1/sqrt(fan_in))."""
    dims = [(FIN1, H1), (H1, H2), (H2, OUT)]
    params = []
    keys = jax.random.split(key, 2 * len(dims))
    for li, (fin, fout) in enumerate(dims):
        bound = 1.0 / math.sqrt(fin)
        w = jax.random.uniform(keys[2 * li], (fin, fout), jnp.float32,
                               minval=-bound, maxval=bound)
        b = jax.random.uniform(keys[2 * li + 1], (1, fout), jnp.float32,
                               minval=-bound, maxval=bound)
        params.extend([w, b])
    return tuple(params)


def reference(x, params):
    w1, b1, w2, b2, w3, b3 = params
    fc1 = jnp.maximum(x @ w1 + b1, 0.0)
    fc2 = jnp.maximum(fc1 @ w2 + b2, 0.0)
    out = jax.nn.sigmoid(fc2 @ w3 + b3)
    return fc1, fc2, out


if __name__ == "__main__":
    key = jax.random.PRNGKey(0)
    pkey, xkey = jax.random.split(key)

    params = init_params(pkey)
    B = 8
    x = jax.random.normal(xkey, (B, FIN1), dtype=jnp.float32)

    fc1, fc2, out = mlp_classification(x, params)
    jax.block_until_ready((fc1, fc2, out))

    # sanity-check against plain-JAX reference
    r1, r2, r3 = reference(x, params)
    assert fc1.shape == (B, H1) and fc2.shape == (B, H2) and out.shape == (B, OUT)
    assert jnp.allclose(fc1, r1, atol=1e-5)
    assert jnp.allclose(fc2, r2, atol=1e-5)
    assert jnp.allclose(out, r3, atol=1e-5)

    print("KERNEL_OK")
</pallas_src>

<mosaic_0001>
module attributes {stable_mosaic.version = 11 : i64} {
  func.func @mlp_kernel(%arg0: i32, %arg1: memref<8x64xf32, #tpu.memory_space<vmem>>, %arg2: memref<344x128xf32, #tpu.memory_space<vmem>>, %arg3: memref<8x128xf32, #tpu.memory_space<vmem>>) attributes {dimension_semantics = [#tpu.dimension_semantics<parallel>], iteration_bounds = array<i64: 1>, scalar_prefetch = 0 : i64, scratch_operands = 0 : i64, tpu.core_type = #tpu.core_type<tc>, window_params = [{transform_indices = @transform_0, window_bounds = array<i64: 8, 64>}, {pipeline_mode = #tpu.pipeline_mode<synchronous>, transform_indices = @transform_1, window_bounds = array<i64: 344, 128>}, {transform_indices = @transform_2, window_bounds = array<i64: 8, 128>}]} {
    %c0 = arith.constant 0 : index
    %c0_0 = arith.constant 0 : index
    %0 = vector.load %arg1[%c0, %c0_0] : memref<8x64xf32, #tpu.memory_space<vmem>>, vector<8x64xf32>
    %c0_1 = arith.constant 0 : index
    %c0_2 = arith.constant 0 : index
    %1 = vector.load %arg2[%c0_1, %c0_2] : memref<344x128xf32, #tpu.memory_space<vmem>>, vector<64x128xf32>
    %c64 = arith.constant 64 : index
    %c0_3 = arith.constant 0 : index
    %2 = vector.load %arg2[%c64, %c0_3] : memref<344x128xf32, #tpu.memory_space<vmem>>, vector<128x128xf32>
    %c192 = arith.constant 192 : index
    %c0_4 = arith.constant 0 : index
    %3 = vector.load %arg2[%c192, %c0_4] : memref<344x128xf32, #tpu.memory_space<vmem>>, vector<128x128xf32>
    %c320 = arith.constant 320 : index
    %c0_5 = arith.constant 0 : index
    %4 = vector.load %arg2[%c320, %c0_5] : memref<344x128xf32, #tpu.memory_space<vmem>>, vector<1x128xf32>
    %c328 = arith.constant 328 : index
    %c0_6 = arith.constant 0 : index
    %5 = vector.load %arg2[%c328, %c0_6] : memref<344x128xf32, #tpu.memory_space<vmem>>, vector<1x128xf32>
    %c336 = arith.constant 336 : index
    %c0_7 = arith.constant 0 : index
    %6 = vector.load %arg2[%c336, %c0_7] : memref<344x128xf32, #tpu.memory_space<vmem>>, vector<1x128xf32>
    %cst = arith.constant dense<0.000000e+00> : vector<8x128xf32>
    %7 = tpu.matmul %0, %1, %cst {dimension_numbers = #tpu.dot_dimension_numbers<[1], [0], [0], [1], [0, 0, 1, 1], [], []>} : vector<8x64xf32>, vector<64x128xf32>, vector<8x128xf32> -> vector<8x128xf32>
    %8 = vector.broadcast %4 : vector<1x128xf32> to vector<8x128xf32>
    %9 = arith.addf %7, %8 : vector<8x128xf32>
    %cst_8 = arith.constant 0.000000e+00 : f32
    %10 = vector.broadcast %cst_8 : f32 to vector<8x128xf32>
    %11 = arith.maximumf %9, %10 : vector<8x128xf32>
    %cst_9 = arith.constant dense<0.000000e+00> : vector<8x128xf32>
    %12 = tpu.matmul %11, %2, %cst_9 {dimension_numbers = #tpu.dot_dimension_numbers<[1], [0], [0], [1], [0, 0, 1, 1], [], []>} : vector<8x128xf32>, vector<128x128xf32>, vector<8x128xf32> -> vector<8x128xf32>
    %13 = vector.broadcast %5 : vector<1x128xf32> to vector<8x128xf32>
    %14 = arith.addf %12, %13 : vector<8x128xf32>
    %cst_10 = arith.constant 0.000000e+00 : f32
    %15 = vector.broadcast %cst_10 : f32 to vector<8x128xf32>
    %16 = arith.maximumf %14, %15 : vector<8x128xf32>
    %cst_11 = arith.constant dense<0.000000e+00> : vector<8x128xf32>
    %17 = tpu.matmul %16, %3, %cst_11 {dimension_numbers = #tpu.dot_dimension_numbers<[1], [0], [0], [1], [0, 0, 1, 1], [], []>} : vector<8x128xf32>, vector<128x128xf32>, vector<8x128xf32> -> vector<8x128xf32>
    %18 = vector.broadcast %6 : vector<1x128xf32> to vector<8x128xf32>
    %19 = arith.addf %17, %18 : vector<8x128xf32>
    %cst_12 = arith.constant 0.000000e+00 : f32
    %20 = vector.broadcast %cst_12 : f32 to vector<8x128xf32>
    %21 = arith.subf %20, %19 : vector<8x128xf32>
    %22 = math.exp %21 : vector<8x128xf32>
    %cst_13 = arith.constant 1.000000e+00 : f32
    %23 = vector.broadcast %cst_13 : f32 to vector<8x128xf32>
    %24 = arith.addf %23, %22 : vector<8x128xf32>
    %cst_14 = arith.constant 1.000000e+00 : f32
    %25 = vector.broadcast %cst_14 : f32 to vector<8x128xf32>
    %26 = arith.divf %25, %24 : vector<8x128xf32>
    %27 = tpu.iota {dimensions = array<i32: 1>} : vector<8x128xi32>
    %c64_i32 = arith.constant 64 : i32
    %28 = vector.broadcast %c64_i32 : i32 to vector<8x128xi32>
    %29 = arith.cmpi slt, %27, %28 : vector<8x128xi32>
    %30 = arith.addf %11, %16 : vector<8x128xf32>
    %31 = arith.select %29, %30, %26 : vector<8x128xi1>, vector<8x128xf32>
    %c0_15 = arith.constant 0 : index
    %c0_16 = arith.constant 0 : index
    %32 = vector.load %arg3[%c0_15, %c0_16] : memref<8x128xf32, #tpu.memory_space<vmem>>, vector<8x128xf32>
    tpu.vector_store %arg3[%c0_15, %c0_16], %31 {strides = array<i32>} : memref<8x128xf32, #tpu.memory_space<vmem>>, vector<8x128xf32>,
    return
  }
  func.func @transform_0(%arg0: i32) -> (i32, i32) {
    %c0_i32 = arith.constant 0 : i32
    %c0_i32_0 = arith.constant 0 : i32
    return %arg0, %c0_i32 : i32, i32
  }
  func.func @transform_1(%arg0: i32) -> (i32, i32) {
    %c0_i32 = arith.constant 0 : i32
    %c0_i32_0 = arith.constant 0 : i32
    %c0_i32_1 = arith.constant 0 : i32
    return %c0_i32, %c0_i32_0 : i32, i32
  }
  func.func @transform_2(%arg0: i32) -> (i32, i32) {
    %c0_i32 = arith.constant 0 : i32
    %c0_i32_0 = arith.constant 0 : i32
    return %arg0, %c0_i32 : i32, i32
  }
}

</mosaic_0001>

<llo_original>
// kernel: tpu_custom_call.1
$region0: #{tpu_custom_call.1}
  #allocation0 [shape = 'u32[]', space=smem, size = 0x4, offset = 0x4, fixed_abs, tag = 'smem constant byte address 0x4 - core index']
  #allocation1 [shape = 'u32[144,128]{1,0:T(1,128)}', space=vmem, size = 0x12000, scoped, tag = 'internal scratch']
  %s0 = inlined_call_operand.hbm [shape: f32[8,64], index: 0, kind: input, shape index: {}]
  %s1 = inlined_call_operand.hbm [shape: f32[344,128], index: 1, kind: input, shape index: {}]
  %s2 = inlined_call_operand.hbm [shape: f32[8,128], index: 2, kind: output, shape index: {}]
  %s3 = sld [smem:[#allocation0]]
  $region26: #{tpu_custom_call.1} parent=0
    _
  %s5 = ssub.s32 1, %s3
  %s6 = scalar_select 0, %s5, %s3
  $region1: #{tpu_custom_call.1} parent=0
    #allocation2 [shape = 'u8[4096]{0}', space=vmem, size = 0x1000, scoped, tag = 'input window, operand 0, single buffered']
    #allocation3 [shape = 's32[1]{0}', space=sflag, size = 0x4, scoped, tag = 'scoped memory for tpu_custom_call.1']
    #allocation4 [shape = 's32[1]{0}', space=sflag, size = 0x4, scoped, tag = 'scoped memory for tpu_custom_call.1']
    #allocation5 [shape = 'u8[176128]{0}', space=vmem, size = 0x2b000, scoped, tag = 'input window, operand 1, single buffered']
    #allocation6 [shape = 's32[1]{0}', space=sflag, size = 0x4, scoped, tag = 'scoped memory for tpu_custom_call.1']
    #allocation7 [shape = 'u8[4096]{0}', space=vmem, size = 0x1000, scoped, tag = 'output window, operand 0, single buffered']
    %7 = vsyncpa [#allocation3], 0
    %8 = vsyncpa [#allocation6], 0
    %9 = vsyncpa [#allocation4], 0
    // Predicated region
    $region2: #{tpu_custom_call.1} parent=1 // pred_check
      _
    $region3: #{tpu_custom_call.1} parent=1 // pred_check_branch
      %11 = sbr.rel (0) target = $region5
    $region4: #{tpu_custom_call.1} parent=1 // pred_region
      %s13 = ssub.s32 128, 128
      %14 = vsyncadd [#allocation3], %s13
      %s16 = sshll.u32 [#allocation2], 4
      %s17 = int_to_ptr.vmem [resolvable:$true] %s16
      %19 = dma.hbm_to_vmem [thread:$0]  %s0, 128, %s17, [#allocation3]
    $region5: #{tpu_custom_call.1} parent=1 // pred_fallthru
      _
    // Predicated region
    $region6: #{tpu_custom_call.1} parent=1 // pred_check
      _
    $region7: #{tpu_custom_call.1} parent=1 // pred_check_branch
      %21 = sbr.rel (0) target = $region9
    $region8: #{tpu_custom_call.1} parent=1 // pred_region
      %s23 = ssub.s32 5504, 5504
      %24 = vsyncadd [#allocation6], %s23
      %s25 = sshll.u32 [#allocation5], 4
      %s26 = int_to_ptr.vmem [resolvable:$true] %s25
      %31 = dma.hbm_to_vmem [thread:$0]  %s1, 5504, %s26, [#allocation6], 128, 128, 8
    $region9: #{tpu_custom_call.1} parent=1 // pred_fallthru
      _
    // Predicated region
    $region10: #{tpu_custom_call.1} parent=1 // pred_check
      _
    $region11: #{tpu_custom_call.1} parent=1 // pred_check_branch
      %33 = sbr.rel (0) target = $region13
    $region12: #{tpu_custom_call.1} parent=1 // pred_region
      %34 = dma.done [#allocation3], 128
    $region13: #{tpu_custom_call.1} parent=1 // pred_fallthru
      _
    // Predicated region
    $region14: #{tpu_custom_call.1} parent=1 // pred_check
      _
    $region15: #{tpu_custom_call.1} parent=1 // pred_check_branch
      %36 = sbr.rel (0) target = $region17
    $region16: #{tpu_custom_call.1} parent=1 // pred_region
      %37 = dma.done [#allocation6], 5504
    $region17: #{tpu_custom_call.1} parent=1 // pred_fallthru
      _
    %v38 = vld [vmem:[#allocation2] sm:$0xff]
    %v39 = vld [vmem:[#allocation5] sm:$0xff]
    %v40 = vld [vmem:[#allocation5 + $0x8] sm:$0xff]
    %v41 = vld [vmem:[#allocation5 + $0x10] sm:$0xff]
    %v42 = vld [vmem:[#allocation5 + $0x18] sm:$0xff]
    %v43 = vld [vmem:[#allocation5 + $0x20] sm:$0xff]
    %v44 = vld [vmem:[#allocation5 + $0x28] sm:$0xff]
    %v45 = vld [vmem:[#allocation5 + $0x30] sm:$0xff]
    %v46 = vld [vmem:[#allocation5 + $0x38] sm:$0xff]
    %v47 = vld [vmem:[#allocation5 + $0x40] sm:$0xff]
    %v48 = vld [vmem:[#allocation5 + $0x48] sm:$0xff]
    %v49 = vld [vmem:[#allocation5 + $0x50] sm:$0xff]
    %v50 = vld [vmem:[#allocation5 + $0x58] sm:$0xff]
    %v51 = vld [vmem:[#allocation5 + $0x60] sm:$0xff]
    %v52 = vld [vmem:[#allocation5 + $0x68] sm:$0xff]
    %v53 = vld [vmem:[#allocation5 + $0x70] sm:$0xff]
    %v54 = vld [vmem:[#allocation5 + $0x78] sm:$0xff]
    %v55 = vld [vmem:[#allocation5 + $0x80] sm:$0xff]
    %v56 = vld [vmem:[#allocation5 + $0x88] sm:$0xff]
    %v57 = vld [vmem:[#allocation5 + $0x90] sm:$0xff]
    %v58 = vld [vmem:[#allocation5 + $0x98] sm:$0xff]
    %v59 = vld [vmem:[#allocation5 + $0xa0] sm:$0xff]
    %v60 = vld [vmem:[#allocation5 + $0xa8] sm:$0xff]
    %v61 = vld [vmem:[#allocation5 + $0xb0] sm:$0xff]
    %v62 = vld [vmem:[#allocation5 + $0xb8] sm:$0xff]
    %v63 = vld [vmem:[#allocation5 + $0xc0] sm:$0xff]
    %v64 = vld [vmem:[#allocation5 + $0xc8] sm:$0xff]
    %v65 = vld [vmem:[#allocation5 + $0xd0] sm:$0xff]
    %v66 = vld [vmem:[#allocation5 + $0xd8] sm:$0xff]
    %v67 = vld [vmem:[#allocation5 + $0xe0] sm:$0xff]
    %v68 = vld [vmem:[#allocation5 + $0xe8] sm:$0xff]
    %v69 = vld [vmem:[#allocation5 + $0xf0] sm:$0xff]
    %v70 = vld [vmem:[#allocation5 + $0xf8] sm:$0xff]
    %v71 = vld [vmem:[#allocation5 + $0x100] sm:$0xff]
    %v72 = vld [vmem:[#allocation5 + $0x108] sm:$0xff]
    %v73 = vld [vmem:[#allocation5 + $0x110] sm:$0xff]
    %v74 = vld [vmem:[#allocation5 + $0x118] sm:$0xff]
    %v75 = vld [vmem:[#allocation5 + $0x120] sm:$0xff]
    %v76 = vld [vmem:[#allocation5 + $0x128] sm:$0xff]
    %v77 = vld [vmem:[#allocation5 + $0x130] sm:$0xff]
    %v78 = vld [vmem:[#allocation5 + $0x138] sm:$0xff]
    %v79 = vld [vmem:[#allocation5 + $0x140] sm:$0x1]
    %v80 = vld [vmem:[#allocation5 + $0x148] sm:$0x1]
    %v81 = vld [vmem:[#allocation5 + $0x150] sm:$0x1]
    %v82 = vlaneseq
    %v83 = vshrl.u32 %v82, 7
    %v84 = vsub.s32 0, %v83
    %v85 = vrot.slane %v79, %v84
    %vm86 = vcmask 523264
    %v88 = vsel %vm86, %v38, 0
    %90 = vmatprep.subr.mxu0 0.0
    %91 = vmatpush1.msra.mxu0 0.0
    %92 = vmatprep.subr.mxu0 0.0
    %93 = vmatpush1.msra.mxu0 0.0
    %94 = vmatprep.subr.mxu0 0.0
    %95 = vmatpush1.msra.mxu0 0.0
    %96 = vmatprep.subr.mxu0 0.0
    %97 = vmatpush1.msra.mxu0 0.0
    %98 = vmatprep.subr.mxu0 0.0
    %99 = vmatpush1.msra.mxu0 0.0
    %100 = vmatprep.subr.mxu0 0.0
    %101 = vmatpush1.msra.mxu0 0.0
    %102 = vmatprep.subr.mxu0 0.0
    %103 = vmatpush1.msra.mxu0 0.0
    %104 = vmatprep.subr.mxu0 0.0
    %105 = vmatpush1.msra.mxu0 0.0
    %106 = vmatprep.subr.mxu0 0.0
    %107 = vmatpush1.msra.mxu0 %v46
    %108 = vmatprep.subr.mxu0 0.0
    %109 = vmatpush1.msra.mxu0 %v45
    %110 = vmatprep.subr.mxu0 0.0
    %111 = vmatpush1.msra.mxu0 %v44
    %112 = vmatprep.subr.mxu0 0.0
    %113 = vmatpush1.msra.mxu0 %v43
    %114 = vmatprep.subr.mxu0 0.0
    %115 = vmatpush1.msra.mxu0 %v42
    %116 = vmatprep.subr.mxu0 0.0
    %117 = vmatpush1.msra.mxu0 %v41
    %118 = vmatprep.subr.mxu0 0.0
    %119 = vmatpush1.msra.mxu0 %v40
    %120 = vmatprep.subr.mxu0 0.0
    %121 = vmatpush1.msra.mxu0 %v39
    %122 = vmatprep.subr.mxu0 0.0
    %123 = vmatpush2.msra.mxu0 0.0
    %124 = vmatprep.subr.mxu0 0.0
    %125 = vmatpush2.msra.mxu0 0.0
    %126 = vmatprep.subr.mxu0 0.0
    %127 = vmatpush2.msra.mxu0 0.0
    %128 = vmatprep.subr.mxu0 0.0
    %129 = vmatpush2.msra.mxu0 0.0
    %130 = vmatprep.subr.mxu0 0.0
    %131 = vmatpush2.msra.mxu0 0.0
    %132 = vmatprep.subr.mxu0 0.0
    %133 = vmatpush2.msra.mxu0 0.0
    %134 = vmatprep.subr.mxu0 0.0
    %135 = vmatpush2.msra.mxu0 0.0
    %136 = vmatprep.subr.mxu0 0.0
    %137 = vmatpush2.msra.mxu0 0.0
    %138 = vmatprep.subr.mxu0 0.0
    %139 = vmatpush2.msra.mxu0 0.0
    %140 = vmatprep.subr.mxu0 0.0
    %141 = vmatpush2.msra.mxu0 0.0
    %142 = vmatprep.subr.mxu0 0.0
    %143 = vmatpush2.msra.mxu0 0.0
    %144 = vmatprep.subr.mxu0 0.0
    %145 = vmatpush2.msra.mxu0 0.0
    %146 = vmatprep.subr.mxu0 0.0
    %147 = vmatpush2.msra.mxu0 0.0
    %148 = vmatprep.subr.mxu0 0.0
    %149 = vmatpush2.msra.mxu0 0.0
    %150 = vmatprep.subr.mxu0 0.0
    %151 = vmatpush2.msra.mxu0 0.0
    %152 = vmatprep.subr.mxu0 0.0
    %153 = vmatpush2.msra.mxu0 0.0
    %154 = vmatprep.mubr.f32.mxu0 0.0
    %155 = vmatmul.mubr.f32.gmra.mxu0 %v88
    %v156 = vpop.f32.mrf.mxu0
    %v157 = vadd.f32 %v85, %v156
    %v158 = vpop.f32.mrf.mxu0
    %159 = vdwg.mxu0
    %v160 = vmax.f32 %v157, 0.0
    %v161 = vlaneseq
    %v162 = vshrl.u32 %v161, 7
    %v163 = vsub.s32 0, %v162
    %v164 = vrot.slane %v80, %v163
    %165 = vmatprep.subr.mxu0 0.0
    %166 = vmatpush1.msra.mxu0 %v62
    %167 = vmatprep.subr.mxu0 0.0
    %168 = vmatpush1.msra.mxu0 %v61
    %169 = vmatprep.subr.mxu0 0.0
    %170 = vmatpush1.msra.mxu0 %v60
    %171 = vmatprep.subr.mxu0 0.0
    %172 = vmatpush1.msra.mxu0 %v59
    %173 = vmatprep.subr.mxu0 0.0
    %174 = vmatpush1.msra.mxu0 %v58
    %175 = vmatprep.subr.mxu0 0.0
    %176 = vmatpush1.msra.mxu0 %v57
    %177 = vmatprep.subr.mxu0 0.0
    %178 = vmatpush1.msra.mxu0 %v56
    %179 = vmatprep.subr.mxu0 0.0
    %180 = vmatpush1.msra.mxu0 %v55
    %181 = vmatprep.subr.mxu0 0.0
    %182 = vmatpush1.msra.mxu0 %v54
    %183 = vmatprep.subr.mxu0 0.0
    %184 = vmatpush1.msra.mxu0 %v53
    %185 = vmatprep.subr.mxu0 0.0
    %186 = vmatpush1.msra.mxu0 %v52
    %187 = vmatprep.subr.mxu0 0.0
    %188 = vmatpush1.msra.mxu0 %v51
    %189 = vmatprep.subr.mxu0 0.0
    %190 = vmatpush1.msra.mxu0 %v50
    %191 = vmatprep.subr.mxu0 0.0
    %192 = vmatpush1.msra.mxu0 %v49
    %193 = vmatprep.subr.mxu0 0.0
    %194 = vmatpush1.msra.mxu0 %v48
    %195 = vmatprep.subr.mxu0 0.0
    %196 = vmatpush1.msra.mxu0 %v47
    %197 = vmatprep.subr.mxu0 0.0
    %198 = vmatpush2.msra.mxu0 0.0
    %199 = vmatprep.subr.mxu0 0.0
    %200 = vmatpush2.msra.mxu0 0.0
    %201 = vmatprep.subr.mxu0 0.0
    %202 = vmatpush2.msra.mxu0 0.0
    %203 = vmatprep.subr.mxu0 0.0
    %204 = vmatpush2.msra.mxu0 0.0
    %205 = vmatprep.subr.mxu0 0.0
    %206 = vmatpush2.msra.mxu0 0.0
    %207 = vmatprep.subr.mxu0 0.0
    %208 = vmatpush2.msra.mxu0 0.0
    %209 = vmatprep.subr.mxu0 0.0
    %210 = vmatpush2.msra.mxu0 0.0
    %211 = vmatprep.subr.mxu0 0.0
    %212 = vmatpush2.msra.mxu0 0.0
    %213 = vmatprep.subr.mxu0 0.0
    %214 = vmatpush2.msra.mxu0 0.0
    %215 = vmatprep.subr.mxu0 0.0
    %216 = vmatpush2.msra.mxu0 0.0
    %217 = vmatprep.subr.mxu0 0.0
    %218 = vmatpush2.msra.mxu0 0.0
    %219 = vmatprep.subr.mxu0 0.0
    %220 = vmatpush2.msra.mxu0 0.0
    %221 = vmatprep.subr.mxu0 0.0
    %222 = vmatpush2.msra.mxu0 0.0
    %223 = vmatprep.subr.mxu0 0.0
    %224 = vmatpush2.msra.mxu0 0.0
    %225 = vmatprep.subr.mxu0 0.0
    %226 = vmatpush2.msra.mxu0 0.0
    %227 = vmatprep.subr.mxu0 0.0
    %228 = vmatpush2.msra.mxu0 0.0
    %229 = vmatprep.mubr.f32.mxu0 0.0
    %230 = vmatmul.mubr.f32.gmra.mxu0 %v160
    %v231 = vpop.f32.mrf.mxu0
    %v232 = vadd.f32 %v164, %v231
    %v233 = vpop.f32.mrf.mxu0
    %234 = vdwg.mxu0
    %v235 = vmax.f32 %v232, 0.0
    %v236 = vlaneseq
    %v237 = vshrl.u32 %v236, 7
    %v238 = vsub.s32 0, %v237
    %v239 = vrot.slane %v81, %v238
    %240 = vmatprep.subr.mxu0 0.0
    %241 = vmatpush1.msra.mxu0 %v78
    %242 = vmatprep.subr.mxu0 0.0
    %243 = vmatpush1.msra.mxu0 %v77
    %244 = vmatprep.subr.mxu0 0.0
    %245 = vmatpush1.msra.mxu0 %v76
    %246 = vmatprep.subr.mxu0 0.0
    %247 = vmatpush1.msra.mxu0 %v75
    %248 = vmatprep.subr.mxu0 0.0
    %249 = vmatpush1.msra.mxu0 %v74
    %250 = vmatprep.subr.mxu0 0.0
    %251 = vmatpush1.msra.mxu0 %v73
    %252 = vmatprep.subr.mxu0 0.0
    %253 = vmatpush1.msra.mxu0 %v72
    %254 = vmatprep.subr.mxu0 0.0
    %255 = vmatpush1.msra.mxu0 %v71
    %256 = vmatprep.subr.mxu0 0.0
    %257 = vmatpush1.msra.mxu0 %v70
    %258 = vmatprep.subr.mxu0 0.0
    %259 = vmatpush1.msra.mxu0 %v69
    %260 = vmatprep.subr.mxu0 0.0
    %261 = vmatpush1.msra.mxu0 %v68
    %262 = vmatprep.subr.mxu0 0.0
    %263 = vmatpush1.msra.mxu0 %v67
    %264 = vmatprep.subr.mxu0 0.0
    %265 = vmatpush1.msra.mxu0 %v66
    %266 = vmatprep.subr.mxu0 0.0
    %267 = vmatpush1.msra.mxu0 %v65
    %268 = vmatprep.subr.mxu0 0.0
    %269 = vmatpush1.msra.mxu0 %v64
    %270 = vmatprep.subr.mxu0 0.0
    %271 = vmatpush1.msra.mxu0 %v63
    %272 = vmatprep.subr.mxu0 0.0
    %273 = vmatpush2.msra.mxu0 0.0
    %274 = vmatprep.subr.mxu0 0.0
    %275 = vmatpush2.msra.mxu0 0.0
    %276 = vmatprep.subr.mxu0 0.0
    %277 = vmatpush2.msra.mxu0 0.0
    %278 = vmatprep.subr.mxu0 0.0
    %279 = vmatpush2.msra.mxu0 0.0
    %280 = vmatprep.subr.mxu0 0.0
    %281 = vmatpush2.msra.mxu0 0.0
    %282 = vmatprep.subr.mxu0 0.0
    %283 = vmatpush2.msra.mxu0 0.0
    %284 = vmatprep.subr.mxu0 0.0
    %285 = vmatpush2.msra.mxu0 0.0
    %286 = vmatprep.subr.mxu0 0.0
    %287 = vmatpush2.msra.mxu0 0.0
    %288 = vmatprep.subr.mxu0 0.0
    %289 = vmatpush2.msra.mxu0 0.0
    %290 = vmatprep.subr.mxu0 0.0
    %291 = vmatpush2.msra.mxu0 0.0
    %292 = vmatprep.subr.mxu0 0.0
    %293 = vmatpush2.msra.mxu0 0.0
    %294 = vmatprep.subr.mxu0 0.0
    %295 = vmatpush2.msra.mxu0 0.0
    %296 = vmatprep.subr.mxu0 0.0
    %297 = vmatpush2.msra.mxu0 0.0
    %298 = vmatprep.subr.mxu0 0.0
    %299 = vmatpush2.msra.mxu0 0.0
    %300 = vmatprep.subr.mxu0 0.0
    %301 = vmatpush2.msra.mxu0 0.0
    %302 = vmatprep.subr.mxu0 0.0
    %303 = vmatpush2.msra.mxu0 0.0
    %304 = vmatprep.mubr.f32.mxu0 0.0
    %305 = vmatmul.mubr.f32.gmra.mxu0 %v235
    %v306 = vpop.f32.mrf.mxu0
    %v307 = vadd.f32 %v239, %v306
    %v308 = vpop.f32.mrf.mxu0
    %309 = vdwg.mxu0
    %v310 = vsub.f32 0.0, %v307
    %v311 = vmul.f32 %v310, 1.442695
    %v312 = vpow.pop %v311
    %v313 = vadd.f32 %v312, 1.0
    %v314 = vrcp.pop %v313
    %v315 = vmul.f32 1.0, %v314
    %v316 = vlaneseq
    %v317 = vand.u32 %v316, 127
    %vm318 = vcmp.lt.s32.totalorder %v317, 64
    %v319 = vadd.f32 %v160, %v235
    %v320 = vsel %vm318, %v319, %v315
    %321 = vst [vmem:[#allocation7] sm:$0xff] %v320
    // Predicated region
    $region18: #{tpu_custom_call.1} parent=1 // pred_check
      _
    $region19: #{tpu_custom_call.1} parent=1 // pred_check_branch
      %323 = sbr.rel (0) target = $region21
    $region20: #{tpu_custom_call.1} parent=1 // pred_region
      %s325 = ssub.s32 128, 128
      %326 = vsyncadd [#allocation4], %s325
      %s328 = sshll.u32 [#allocation7], 4
      %s329 = int_to_ptr.vmem [resolvable:$true] %s328
      %331 = dma.vmem_to_hbm [thread:$0]  %s329, 128, %s2, [#allocation4]
    $region21: #{tpu_custom_call.1} parent=1 // pred_fallthru
      _
    // Predicated region
    $region22: #{tpu_custom_call.1} parent=1 // pred_check
      _
    $region23: #{tpu_custom_call.1} parent=1 // pred_check_branch
      %333 = sbr.rel (0) target = $region25
    $region24: #{tpu_custom_call.1} parent=1 // pred_region
      %334 = dma.done [#allocation4], 128
    $region25: #{tpu_custom_call.1} parent=1 // pred_fallthru
      _
    %335 = vsyncpa [#allocation3], 1
    %336 = vsyncpa [#allocation6], 1
    %337 = vsyncpa [#allocation4], 1

</llo_original>
